<compile_context>
chip_gen: v7x
topology: tpu7x:2x2x1
jax: 0.10.0
libtpu: 0.0.40
codegen_flags: <defaults>
</compile_context>

<pallas_src>
import math

import jax
import jax.numpy as jnp
from jax import lax
from jax.experimental import pallas as pl
from jax.experimental.pallas import tpu as pltpu


def _round_up(a, b):
    return ((a + b - 1) // b) * b


def _pick_tile(dim, pref):
    """Pick a tile for `dim`.

    Returns (tile, dim_pad): tile is a multiple of 128 (or == dim when the whole
    dim fits in a single block), tile <= max(pref, 128), and tile divides dim_pad
    (dim_pad >= dim; operands are zero-padded once to dim_pad when needed).
    Never falls back to a huge full-dimension block for non-128-multiple dims.
    """
    if dim <= pref:
        return dim, dim
    pref = max(128, (pref // 128) * 128)
    for cand in range(pref, 127, -128):          # exact 128-multiple divisor
        if dim % cand == 0:
            return cand, dim
    dim128 = _round_up(dim, 128)                 # fallback: pad dim to 128-mult
    for cand in range(pref, 127, -128):
        if dim128 % cand == 0:
            return cand, dim128
    return 128, dim128


def _vmem_footprint(tm, tn, tk, r, xb, wb, ob, enable_lora, use_bias, k_tiled):
    """Conservative double-buffered VMEM footprint (bytes) incl. sublane/lane pad."""
    r_sub = _round_up(max(r, 1), 8)
    r_lane = _round_up(max(r, 1), 128)
    f = 2 * tm * tk * xb                         # x blocks
    f += 2 * tn * tk * wb                        # W blocks
    f += 2 * tm * tn * ob                        # out blocks
    if enable_lora:
        f += 2 * r_sub * tk * wb                 # A blocks
        f += 2 * tn * r_lane * wb                # B blocks
    if use_bias:
        f += 2 * 8 * tn * 4                      # bias blocks (f32)
    if k_tiled:
        f += tm * tn * 4                         # f32 accumulator scratch
        if enable_lora:
            f += tm * r_lane * 4                 # xa scratch
    return f


def _make_lora_kernel(*, scaling, enable_lora, use_bias, k_tiled):
    def kernel(*refs):
        it = iter(refs)
        x_ref = next(it)                                   # (tm, tk)
        w_ref = next(it)                                   # (tn, tk)  W (OUT, IN) tile
        a_ref = next(it) if enable_lora else None          # (R, tk)   A (R, IN) tile
        b_ref = next(it) if enable_lora else None          # (tn, R)   B (OUT, R) tile
        bias_ref = next(it) if use_bias else None          # (1, tn)   f32
        o_ref = next(it)                                   # (tm, tn)
        acc_ref = next(it) if k_tiled else None            # (tm, tn)  f32
        xa_ref = next(it) if (k_tiled and enable_lora) else None   # (tm, R) f32

        x = x_ref[...]

        # Base GEMM: contract the IN (last) axis of both operands -> (tm, tn).
        base = lax.dot_general(x, w_ref[...], (((1,), (1,)), ((), ())),
                               preferred_element_type=jnp.float32)
        if enable_lora:
            # x @ A^T for this K slice -> (tm, R).
            xa = lax.dot_general(x, a_ref[...], (((1,), (1,)), ((), ())),
                                 preferred_element_type=jnp.float32)

        def _epilogue(acc, xa_full):
            out = acc
            if enable_lora:
                # Scale the tiny (tm, R) intermediate, not the (tm, tn) result.
                # (bf16 mode: cast to the weight dtype costs a hair of precision.)
                lora_in = (xa_full * scaling).astype(b_ref.dtype)
                out = out + lax.dot_general(
                    lora_in, b_ref[...], (((1,), (1,)), ((), ())),
                    preferred_element_type=jnp.float32)
            if use_bias:
                out = out + bias_ref[...]
            o_ref[...] = out.astype(o_ref.dtype)

        if not k_tiled:
            # K axis collapsed: one dot per (i, j) block, no accumulator RMW.
            _epilogue(base, xa if enable_lora else None)
        else:
            k = pl.program_id(2)
            nk = pl.num_programs(2)

            @pl.when(k == 0)
            def _init():
                acc_ref[...] = jnp.zeros_like(acc_ref)
                if enable_lora:
                    xa_ref[...] = jnp.zeros_like(xa_ref)

            acc_ref[...] += base
            if enable_lora:
                # xa is re-accumulated per (i, j) block so both i and j grid
                # axes remain "parallel" (no megacore serialization).
                xa_ref[...] += xa

            @pl.when(k == nk - 1)
            def _final():
                _epilogue(acc_ref[...], xa_ref[...] if enable_lora else None)

    return kernel


def lora_linear(x, base_weight, A=None, B=None, bias=None, *, scaling=2.0,
                enable_lora=False, tm=512, tn=512, tk=4096,
                compute_dtype=None, vmem_budget_bytes=48 * 1024 * 1024):
    """x: (Bt, S, IN); base_weight: (OUT, IN); A: (R, IN); B: (OUT, R); bias: (OUT,)|None."""
    Bt, S, IN = x.shape
    OUT, IN_w = base_weight.shape
    assert IN_w == IN
    use_bias = bias is not None
    R = 0
    if enable_lora:
        assert A is not None and B is not None
        R = A.shape[0]
        assert A.shape == (R, IN) and B.shape == (OUT, R)

    if compute_dtype is not None:
        x = x.astype(compute_dtype)
        base_weight = base_weight.astype(compute_dtype)
        if enable_lora:
            A = A.astype(compute_dtype)
            B = B.astype(compute_dtype)

    out_dtype = x.dtype
    xb = jnp.dtype(x.dtype).itemsize
    wb = jnp.dtype(base_weight.dtype).itemsize
    ob = jnp.dtype(out_dtype).itemsize

    M = Bt * S

    # ---- tile selection -----------------------------------------------------
    if M <= tm:
        tm_eff = M                               # whole M in one block (legal: full dim)
    else:
        tm_eff = max(8, (tm // 8) * 8)           # cdiv grid masks the ragged last block
    tn_eff, OUT_pad = _pick_tile(OUT, tn)
    tk_eff, IN_pad = _pick_tile(IN, tk)          # tk == IN collapses the K grid axis

    # Shrink tiles until the double-buffered footprint fits the VMEM budget
    # (48 MiB default keeps headroom under v7x's 64 MiB/TC; v5e/v6e have 128).
    # Order: tk first (but not below 512 -> v5e vst slot), then tm, then tn.
    def fits(tm_, tn_, tk_, in_pad_):
        return _vmem_footprint(tm_, tn_, tk_, R, xb, wb, ob, enable_lora,
                               use_bias, in_pad_ // tk_ > 1) <= vmem_budget_bytes

    for _ in range(64):
        if fits(tm_eff, tn_eff, tk_eff, IN_pad):
            break
        if tk_eff > 512:
            tk_eff, IN_pad = _pick_tile(IN, tk_eff // 2)
        elif tm_eff > 256:
            tm_eff = max(256, (tm_eff // 2 // 8) * 8)
        elif tn_eff > 256:
            tn_eff, OUT_pad = _pick_tile(OUT, tn_eff // 2)
        elif tk_eff > 128:
            tk_eff, IN_pad = _pick_tile(IN, tk_eff // 2)
        elif tm_eff > 8:
            tm_eff = max(8, (tm_eff // 2 // 8) * 8)
        else:
            break

    grid_m = pl.cdiv(M, tm_eff)
    grid_n = OUT_pad // tn_eff
    nk = IN_pad // tk_eff
    k_tiled = nk > 1

    # ---- one-time operand zero-padding (only for non-128-multiple OUT/IN) ----
    x2d = x.reshape(M, IN)
    W = base_weight
    if IN_pad != IN:
        x2d = jnp.pad(x2d, ((0, 0), (0, IN_pad - IN)))
        W = jnp.pad(W, ((0, 0), (0, IN_pad - IN)))
        if enable_lora:
            A = jnp.pad(A, ((0, 0), (0, IN_pad - IN)))
    if OUT_pad != OUT:
        W = jnp.pad(W, ((0, OUT_pad - OUT), (0, 0)))
        if enable_lora:
            B = jnp.pad(B, ((0, OUT_pad - OUT), (0, 0)))
    if use_bias:
        bias2d = bias.astype(jnp.float32).reshape(1, OUT)
        if OUT_pad != OUT:
            bias2d = jnp.pad(bias2d, ((0, 0), (0, OUT_pad - OUT)))

    # ---- grid / specs ---------------------------------------------------------
    if k_tiled:
        grid = (grid_m, grid_n, nk)
        dims = ("parallel", "parallel", "arbitrary")
        x_map = lambda i, j, k: (i, k)
        w_map = lambda i, j, k: (j, k)
        a_map = lambda i, j, k: (0, k)
        b_map = lambda i, j, k: (j, 0)
        bias_map = lambda i, j, k: (0, j)
        out_map = lambda i, j, k: (i, j)
    else:
        grid = (grid_m, grid_n)
        dims = ("parallel", "parallel")
        x_map = lambda i, j: (i, 0)
        w_map = lambda i, j: (j, 0)
        a_map = lambda i, j: (0, 0)
        b_map = lambda i, j: (j, 0)
        bias_map = lambda i, j: (0, j)
        out_map = lambda i, j: (i, j)

    operands = [x2d, W]
    in_specs = [pl.BlockSpec((tm_eff, tk_eff), x_map),
                pl.BlockSpec((tn_eff, tk_eff), w_map)]
    if enable_lora:
        operands += [A, B]
        in_specs += [pl.BlockSpec((R, tk_eff), a_map),
                     pl.BlockSpec((tn_eff, R), b_map)]
    if use_bias:
        operands.append(bias2d)
        in_specs.append(pl.BlockSpec((1, tn_eff), bias_map))

    scratch_shapes = []
    if k_tiled:
        scratch_shapes.append(pltpu.VMEM((tm_eff, tn_eff), jnp.float32))
        if enable_lora:
            scratch_shapes.append(pltpu.VMEM((tm_eff, R), jnp.float32))

    fp = _vmem_footprint(tm_eff, tn_eff, tk_eff, R, xb, wb, ob,
                         enable_lora, use_bias, k_tiled)
    vmem_limit = int(fp * 1.4) + (2 << 20)       # actual footprint + headroom
    vmem_limit = max(vmem_limit, 32 << 20)       # floor for compiler scratch
    vmem_limit = min(vmem_limit, 112 << 20)

    kernel = _make_lora_kernel(scaling=float(scaling),
                               enable_lora=bool(enable_lora),
                               use_bias=use_bias,
                               k_tiled=k_tiled)

    out2d = pl.pallas_call(
        kernel,
        out_shape=jax.ShapeDtypeStruct((M, OUT_pad), out_dtype),
        grid_spec=pltpu.PrefetchScalarGridSpec(
            num_scalar_prefetch=0,
            grid=grid,
            in_specs=in_specs,
            out_specs=pl.BlockSpec((tm_eff, tn_eff), out_map),
            scratch_shapes=scratch_shapes,
        ),
        compiler_params=pltpu.CompilerParams(
            dimension_semantics=dims,
            vmem_limit_bytes=vmem_limit),
    )(*operands)

    if OUT_pad != OUT:
        out2d = out2d[:, :OUT]
    return out2d.reshape(Bt, S, OUT)


def _reference(x, base_weight, A, B, bias, scaling, enable_lora):
    hp = lax.Precision.HIGHEST
    out = jnp.einsum("bsi,oi->bso", x, base_weight, precision=hp)
    if enable_lora:
        out = out + scaling * jnp.einsum("bsi,ri,or->bso", x, A, B, precision=hp)
    if bias is not None:
        out = out + bias
    return out


if __name__ == "__main__":
    batch, seq = 2, 8
    in_features, out_features = 256, 256
    r, alpha = 4, 8
    scaling = alpha / r

    key = jax.random.PRNGKey(0)
    kx, kw, ka, kb, kbias, kx2 = jax.random.split(key, 6)

    # kaiming_uniform(a=sqrt(5)) -> U(-bound, bound), bound = 1/sqrt(in_features)
    bound = 1.0 / math.sqrt(in_features)
    base_weight = jax.random.uniform(
        kw, (out_features, in_features), jnp.float32, -bound, bound)
    # PyTorch inits A, B to zeros; use small random values here so the LoRA
    # path is numerically exercised (synthetic kernel test, not a checkpoint).
    A = 0.02 * jax.random.normal(ka, (r, in_features), jnp.float32)
    B = 0.02 * jax.random.normal(kb, (out_features, r), jnp.float32)
    bias = 0.1 * jax.random.normal(kbias, (out_features,), jnp.float32)
    x = jax.random.normal(kx, (batch, seq, in_features), jnp.float32)

    ref = _reference(x, base_weight, A, B, bias, scaling, True)

    # 1) f32, LoRA + bias, default tiles (IN fits -> K axis collapsed).
    out = lora_linear(x, base_weight, A, B, bias, scaling=scaling, enable_lora=True)
    out = jax.block_until_ready(out)
    assert out.shape == (batch, seq, out_features)
    assert jnp.allclose(out, ref, atol=1e-4, rtol=1e-4), "f32 mismatch"

    # 2) small explicit tiles -> exercises the K-tiled path (f32 accumulator
    #    + per-(i,j) xa accumulation).
    out_t = lora_linear(x, base_weight, A, B, bias, scaling=scaling,
                        enable_lora=True, tm=8, tn=128, tk=128)
    out_t = jax.block_until_ready(out_t)
    assert jnp.allclose(out_t, ref, atol=1e-4, rtol=1e-4), "tiled mismatch"

    # 3) ragged rows: M = 2*9 = 18 with tm=8 -> cdiv grid and masked final row
    #    block (no wrapper-side pad of x / slice of out).
    x_rag = jax.random.normal(kx2, (batch, 9, in_features), jnp.float32)
    ref_rag = _reference(x_rag, base_weight, A, B, bias, scaling, True)
    out_rag = lora_linear(x_rag, base_weight, A, B, bias, scaling=scaling,
                          enable_lora=True, tm=8, tn=128, tk=256)
    out_rag = jax.block_until_ready(out_rag)
    assert out_rag.shape == (batch, 9, out_features)
    assert jnp.allclose(out_rag, ref_rag, atol=1e-4, rtol=1e-4), "ragged-M mismatch"

    # 4) base-only config: LoRA/bias operands omitted entirely.
    out_b = lora_linear(x, base_weight, scaling=scaling, enable_lora=False)
    out_b = jax.block_until_ready(out_b)
    ref_b = _reference(x, base_weight, None, None, None, scaling, False)
    assert jnp.allclose(out_b, ref_b, atol=1e-4, rtol=1e-4), "base-only mismatch"

    # 5) bf16 operands with f32 MXU accumulation (main perf configuration).
    out_bf = lora_linear(x, base_weight, A, B, bias, scaling=scaling,
                         enable_lora=True, compute_dtype=jnp.bfloat16)
    out_bf = jax.block_until_ready(out_bf)
    assert out_bf.dtype == jnp.bfloat16
    assert jnp.allclose(out_bf.astype(jnp.float32), ref,
                        atol=5e-2, rtol=5e-2), "bf16 mismatch"

    print("KERNEL_OK")
</pallas_src>

<mosaic_0001>
module attributes {stable_mosaic.version = 11 : i64} {
  func.func @kernel(%arg0: i32, %arg1: i32, %arg2: memref<16x256xf32, #tpu.memory_space<vmem>>, %arg3: memref<256x256xf32, #tpu.memory_space<vmem>>, %arg4: memref<4x256xf32, #tpu.memory_space<vmem>>, %arg5: memref<256x4xf32, #tpu.memory_space<vmem>>, %arg6: memref<1x256xf32, #tpu.memory_space<vmem>>, %arg7: memref<16x256xf32, #tpu.memory_space<vmem>>) attributes {dimension_semantics = [#tpu.dimension_semantics<parallel>, #tpu.dimension_semantics<parallel>], iteration_bounds = array<i64: 1, 1>, scalar_prefetch = 0 : i64, scratch_operands = 0 : i64, tpu.core_type = #tpu.core_type<tc>, window_params = [{transform_indices = @transform_0, window_bounds = array<i64: 16, 256>}, {transform_indices = @transform_1, window_bounds = array<i64: 256, 256>}, {pipeline_mode = #tpu.pipeline_mode<synchronous>, transform_indices = @transform_2, window_bounds = array<i64: 4, 256>}, {transform_indices = @transform_3, window_bounds = array<i64: 256, 4>}, {transform_indices = @transform_4, window_bounds = array<i64: 1, 256>}, {transform_indices = @transform_5, window_bounds = array<i64: 16, 256>}]} {
    %c0 = arith.constant 0 : index
    %c0_0 = arith.constant 0 : index
    %0 = vector.load %arg2[%c0, %c0_0] : memref<16x256xf32, #tpu.memory_space<vmem>>, vector<16x256xf32>
    %c0_1 = arith.constant 0 : index
    %c0_2 = arith.constant 0 : index
    %1 = vector.load %arg3[%c0_1, %c0_2] : memref<256x256xf32, #tpu.memory_space<vmem>>, vector<256x256xf32>
    %cst = arith.constant dense<0.000000e+00> : vector<16x256xf32>
    %2 = tpu.matmul %0, %1, %cst {dimension_numbers = #tpu.dot_dimension_numbers<[1], [1], [0], [0], [0, 0, 1, 0], [], []>} : vector<16x256xf32>, vector<256x256xf32>, vector<16x256xf32> -> vector<16x256xf32>
    %c0_3 = arith.constant 0 : index
    %c0_4 = arith.constant 0 : index
    %3 = vector.load %arg4[%c0_3, %c0_4] : memref<4x256xf32, #tpu.memory_space<vmem>>, vector<4x256xf32>
    %cst_5 = arith.constant dense<0.000000e+00> : vector<16x4xf32>
    %4 = tpu.matmul %0, %3, %cst_5 {dimension_numbers = #tpu.dot_dimension_numbers<[1], [1], [0], [0], [0, 0, 1, 0], [], []>} : vector<16x256xf32>, vector<4x256xf32>, vector<16x4xf32> -> vector<16x4xf32>
    %cst_6 = arith.constant 2.000000e+00 : f32
    %5 = vector.broadcast %cst_6 : f32 to vector<16x4xf32>
    %6 = arith.mulf %4, %5 : vector<16x4xf32>
    %c0_7 = arith.constant 0 : index
    %c0_8 = arith.constant 0 : index
    %7 = vector.load %arg5[%c0_7, %c0_8] : memref<256x4xf32, #tpu.memory_space<vmem>>, vector<256x4xf32>
    %cst_9 = arith.constant dense<0.000000e+00> : vector<16x256xf32>
    %8 = tpu.matmul %6, %7, %cst_9 {dimension_numbers = #tpu.dot_dimension_numbers<[1], [1], [0], [0], [0, 0, 1, 0], [], []>} : vector<16x4xf32>, vector<256x4xf32>, vector<16x256xf32> -> vector<16x256xf32>
    %9 = arith.addf %2, %8 : vector<16x256xf32>
    %c0_10 = arith.constant 0 : index
    %c0_11 = arith.constant 0 : index
    %10 = vector.load %arg6[%c0_10, %c0_11] : memref<1x256xf32, #tpu.memory_space<vmem>>, vector<1x256xf32>
    %11 = vector.broadcast %10 : vector<1x256xf32> to vector<16x256xf32>
    %12 = arith.addf %9, %11 : vector<16x256xf32>
    %c0_12 = arith.constant 0 : index
    %c0_13 = arith.constant 0 : index
    %13 = vector.load %arg7[%c0_12, %c0_13] : memref<16x256xf32, #tpu.memory_space<vmem>>, vector<16x256xf32>
    tpu.vector_store %arg7[%c0_12, %c0_13], %12 {strides = array<i32>} : memref<16x256xf32, #tpu.memory_space<vmem>>, vector<16x256xf32>,
    return
  }
  func.func @transform_0(%arg0: i32, %arg1: i32) -> (i32, i32) {
    %c0_i32 = arith.constant 0 : i32
    %c0_i32_0 = arith.constant 0 : i32
    return %arg0, %c0_i32 : i32, i32
  }
  func.func @transform_1(%arg0: i32, %arg1: i32) -> (i32, i32) {
    %c0_i32 = arith.constant 0 : i32
    %c0_i32_0 = arith.constant 0 : i32
    return %arg1, %c0_i32 : i32, i32
  }
  func.func @transform_2(%arg0: i32, %arg1: i32) -> (i32, i32) {
    %c0_i32 = arith.constant 0 : i32
    %c0_i32_0 = arith.constant 0 : i32
    %c0_i32_1 = arith.constant 0 : i32
    return %c0_i32, %c0_i32_0 : i32, i32
  }
  func.func @transform_3(%arg0: i32, %arg1: i32) -> (i32, i32) {
    %c0_i32 = arith.constant 0 : i32
    %c0_i32_0 = arith.constant 0 : i32
    return %arg1, %c0_i32 : i32, i32
  }
  func.func @transform_4(%arg0: i32, %arg1: i32) -> (i32, i32) {
    %c0_i32 = arith.constant 0 : i32
    %c0_i32_0 = arith.constant 0 : i32
    return %c0_i32, %arg1 : i32, i32
  }
  func.func @transform_5(%arg0: i32, %arg1: i32) -> (i32, i32) {
    %c0_i32 = arith.constant 0 : i32
    return %arg0, %arg1 : i32, i32
  }
}

</mosaic_0001>

<llo_original>
// kernel: tpu_custom_call.1
$region0: #{tpu_custom_call.1}
  #allocation0 [shape = 'u32[]', space=smem, size = 0x4, offset = 0x4, fixed_abs, tag = 'smem constant byte address 0x4 - core index']
  #allocation1 [shape = 'u32[144,128]{1,0:T(1,128)}', space=vmem, size = 0x12000, scoped, tag = 'internal scratch']
  %s0 = inlined_call_operand.vmem [shape: f32[16,256], index: 0, kind: input, shape index: {}]
  %s1 = inlined_call_operand.hbm [shape: f32[256,256], index: 1, kind: input, shape index: {}]
  %s2 = inlined_call_operand.vmem [shape: f32[4,256], index: 2, kind: input, shape index: {}]
  %s3 = inlined_call_operand.vmem [shape: f32[256,4], index: 3, kind: input, shape index: {}]
  %s4 = inlined_call_operand.vmem [shape: f32[1,256], index: 4, kind: input, shape index: {}]
  %s5 = inlined_call_operand.hbm [shape: f32[16,256], index: 5, kind: output, shape index: {}]
  %s6 = sld [smem:[#allocation0]]
  $region34: #{tpu_custom_call.1} parent=0
    _
  %s8 = ssub.s32 1, %s6
  %s9 = scalar_select 0, %s8, %s6
  $region1: #{tpu_custom_call.1} parent=0
    #allocation2 [shape = 'u8[262144]{0}', space=vmem, size = 0x40000, scoped, tag = 'input window, operand 1, single buffered']
    #allocation3 [shape = 's32[1]{0}', space=sflag, size = 0x4, scoped, tag = 'scoped memory for tpu_custom_call.1']
    #allocation4 [shape = 's32[1]{0}', space=sflag, size = 0x4, scoped, tag = 'scoped memory for tpu_custom_call.1']
    #allocation5 [shape = 'u8[16384]{0}', space=vmem, size = 0x4000, scoped, tag = 'output window, operand 0, single buffered']
    %10 = vsyncpa [#allocation3], 0
    %11 = vsyncpa [#allocation4], 0
    // Predicated region
    $region2: #{tpu_custom_call.1} parent=1 // pred_check
      _
    $region3: #{tpu_custom_call.1} parent=1 // pred_check_branch
      %13 = sbr.rel (0) target = $region5
    $region4: #{tpu_custom_call.1} parent=1 // pred_region
      _
    $region5: #{tpu_custom_call.1} parent=1 // pred_fallthru
      _
    // Predicated region
    $region6: #{tpu_custom_call.1} parent=1 // pred_check
      _
    $region7: #{tpu_custom_call.1} parent=1 // pred_check_branch
      %15 = sbr.rel (0) target = $region9
    $region8: #{tpu_custom_call.1} parent=1 // pred_region
      %s17 = ssub.s32 8192, 8192
      %18 = vsyncadd [#allocation3], %s17
      %s19 = sshll.u32 [#allocation2], 4
      %s20 = int_to_ptr.vmem [resolvable:$true] %s19
      %25 = dma.hbm_to_vmem [thread:$0]  %s1, 8192, %s20, [#allocation3], 256, 256, 16
    $region9: #{tpu_custom_call.1} parent=1 // pred_fallthru
      _
    // Predicated region
    $region10: #{tpu_custom_call.1} parent=1 // pred_check
      _
    $region11: #{tpu_custom_call.1} parent=1 // pred_check_branch
      %27 = sbr.rel (0) target = $region13
    $region12: #{tpu_custom_call.1} parent=1 // pred_region
      _
    $region13: #{tpu_custom_call.1} parent=1 // pred_fallthru
      _
    // Predicated region
    $region14: #{tpu_custom_call.1} parent=1 // pred_check
      _
    $region15: #{tpu_custom_call.1} parent=1 // pred_check_branch
      %29 = sbr.rel (0) target = $region17
    $region16: #{tpu_custom_call.1} parent=1 // pred_region
      _
    $region17: #{tpu_custom_call.1} parent=1 // pred_fallthru
      _
    // Predicated region
    $region18: #{tpu_custom_call.1} parent=1 // pred_check
      _
    $region19: #{tpu_custom_call.1} parent=1 // pred_check_branch
      %31 = sbr.rel (0) target = $region21
    $region20: #{tpu_custom_call.1} parent=1 // pred_region
      _
    $region21: #{tpu_custom_call.1} parent=1 // pred_fallthru
      _
    // Predicated region
    $region22: #{tpu_custom_call.1} parent=1 // pred_check
      _
    $region23: #{tpu_custom_call.1} parent=1 // pred_check_branch
      %33 = sbr.rel (0) target = $region25
    $region24: #{tpu_custom_call.1} parent=1 // pred_region
      %34 = dma.done [#allocation3], 8192
    $region25: #{tpu_custom_call.1} parent=1 // pred_fallthru
      _
    %v35 = vld [vmem:[%s0] sm:$0xff]
    %v36 = vld [vmem:[%s0 + $0x8] sm:$0xff]
    %v37 = vld [vmem:[%s0 + $0x10] sm:$0xff]
    %v38 = vld [vmem:[%s0 + $0x18] sm:$0xff]
    %v39 = vld [vmem:[#allocation2] sm:$0xff]
    %v40 = vld [vmem:[#allocation2 + $0x8] sm:$0xff]
    %v41 = vld [vmem:[#allocation2 + $0x10] sm:$0xff]
    %v42 = vld [vmem:[#allocation2 + $0x18] sm:$0xff]
    %v43 = vld [vmem:[#allocation2 + $0x20] sm:$0xff]
    %v44 = vld [vmem:[#allocation2 + $0x28] sm:$0xff]
    %v45 = vld [vmem:[#allocation2 + $0x30] sm:$0xff]
    %v46 = vld [vmem:[#allocation2 + $0x38] sm:$0xff]
    %v47 = vld [vmem:[#allocation2 + $0x40] sm:$0xff]
    %v48 = vld [vmem:[#allocation2 + $0x48] sm:$0xff]
    %v49 = vld [vmem:[#allocation2 + $0x50] sm:$0xff]
    %v50 = vld [vmem:[#allocation2 + $0x58] sm:$0xff]
    %v51 = vld [vmem:[#allocation2 + $0x60] sm:$0xff]
    %v52 = vld [vmem:[#allocation2 + $0x68] sm:$0xff]
    %v53 = vld [vmem:[#allocation2 + $0x70] sm:$0xff]
    %v54 = vld [vmem:[#allocation2 + $0x78] sm:$0xff]
    %v55 = vld [vmem:[#allocation2 + $0x80] sm:$0xff]
    %v56 = vld [vmem:[#allocation2 + $0x88] sm:$0xff]
    %v57 = vld [vmem:[#allocation2 + $0x90] sm:$0xff]
    %v58 = vld [vmem:[#allocation2 + $0x98] sm:$0xff]
    %v59 = vld [vmem:[#allocation2 + $0xa0] sm:$0xff]
    %v60 = vld [vmem:[#allocation2 + $0xa8] sm:$0xff]
    %v61 = vld [vmem:[#allocation2 + $0xb0] sm:$0xff]
    %v62 = vld [vmem:[#allocation2 + $0xb8] sm:$0xff]
    %v63 = vld [vmem:[#allocation2 + $0xc0] sm:$0xff]
    %v64 = vld [vmem:[#allocation2 + $0xc8] sm:$0xff]
    %v65 = vld [vmem:[#allocation2 + $0xd0] sm:$0xff]
    %v66 = vld [vmem:[#allocation2 + $0xd8] sm:$0xff]
    %v67 = vld [vmem:[#allocation2 + $0xe0] sm:$0xff]
    %v68 = vld [vmem:[#allocation2 + $0xe8] sm:$0xff]
    %v69 = vld [vmem:[#allocation2 + $0xf0] sm:$0xff]
    %v70 = vld [vmem:[#allocation2 + $0xf8] sm:$0xff]
    %v71 = vld [vmem:[#allocation2 + $0x100] sm:$0xff]
    %v72 = vld [vmem:[#allocation2 + $0x108] sm:$0xff]
    %v73 = vld [vmem:[#allocation2 + $0x110] sm:$0xff]
    %v74 = vld [vmem:[#allocation2 + $0x118] sm:$0xff]
    %v75 = vld [vmem:[#allocation2 + $0x120] sm:$0xff]
    %v76 = vld [vmem:[#allocation2 + $0x128] sm:$0xff]
    %v77 = vld [vmem:[#allocation2 + $0x130] sm:$0xff]
    %v78 = vld [vmem:[#allocation2 + $0x138] sm:$0xff]
    %v79 = vld [vmem:[#allocation2 + $0x140] sm:$0xff]
    %v80 = vld [vmem:[#allocation2 + $0x148] sm:$0xff]
    %v81 = vld [vmem:[#allocation2 + $0x150] sm:$0xff]
    %v82 = vld [vmem:[#allocation2 + $0x158] sm:$0xff]
    %v83 = vld [vmem:[#allocation2 + $0x160] sm:$0xff]
    %v84 = vld [vmem:[#allocation2 + $0x168] sm:$0xff]
    %v85 = vld [vmem:[#allocation2 + $0x170] sm:$0xff]
    %v86 = vld [vmem:[#allocation2 + $0x178] sm:$0xff]
    %v87 = vld [vmem:[#allocation2 + $0x180] sm:$0xff]
    %v88 = vld [vmem:[#allocation2 + $0x188] sm:$0xff]
    %v89 = vld [vmem:[#allocation2 + $0x190] sm:$0xff]
    %v90 = vld [vmem:[#allocation2 + $0x198] sm:$0xff]
    %v91 = vld [vmem:[#allocation2 + $0x1a0] sm:$0xff]
    %v92 = vld [vmem:[#allocation2 + $0x1a8] sm:$0xff]
    %v93 = vld [vmem:[#allocation2 + $0x1b0] sm:$0xff]
    %v94 = vld [vmem:[#allocation2 + $0x1b8] sm:$0xff]
    %v95 = vld [vmem:[#allocation2 + $0x1c0] sm:$0xff]
    %v96 = vld [vmem:[#allocation2 + $0x1c8] sm:$0xff]
    %v97 = vld [vmem:[#allocation2 + $0x1d0] sm:$0xff]
    %v98 = vld [vmem:[#allocation2 + $0x1d8] sm:$0xff]
    %v99 = vld [vmem:[#allocation2 + $0x1e0] sm:$0xff]
    %v100 = vld [vmem:[#allocation2 + $0x1e8] sm:$0xff]
    %v101 = vld [vmem:[#allocation2 + $0x1f0] sm:$0xff]
    %v102 = vld [vmem:[#allocation2 + $0x1f8] sm:$0xff]
    %v103 = vld [vmem:[%s2] sm:$0xff]
    %v105 = vcombine.high %v103, %v103
    %107 = vmatprep.subr.mxu0 %v105
    %108 = vmatpush1.xpose.msra.mxu0 %v103
    %109 = vmatprep.subr.mxu0 0.0
    %110 = vmatpush1.xpose.msra.mxu0 0.0
    %111 = vmatprep.subr.mxu0 0.0
    %112 = vmatpush1.xpose.msra.mxu0 0.0
    %113 = vmatprep.subr.mxu0 0.0
    %114 = vmatpush1.xpose.msra.mxu0 0.0
    %115 = vmatprep.subr.mxu0 0.0
    %116 = vmatpush1.xpose.msra.mxu0 0.0
    %117 = vmatprep.subr.mxu0 0.0
    %118 = vmatpush1.xpose.msra.mxu0 0.0
    %119 = vmatprep.subr.mxu0 0.0
    %120 = vmatpush1.xpose.msra.mxu0 0.0
    %121 = vmatprep.subr.mxu0 0.0
    %122 = vmatpush1.xpose.msra.mxu0 0.0
    %123 = vmatprep.subr.mxu0 0.0
    %124 = vmatpush1.xpose.msra.mxu0 0.0
    %125 = vmatprep.subr.mxu0 0.0
    %126 = vmatpush1.xpose.msra.mxu0 0.0
    %127 = vmatprep.subr.mxu0 0.0
    %128 = vmatpush1.xpose.msra.mxu0 0.0
    %129 = vmatprep.subr.mxu0 0.0
    %130 = vmatpush1.xpose.msra.mxu0 0.0
    %131 = vmatprep.subr.mxu0 0.0
    %132 = vmatpush1.xpose.msra.mxu0 0.0
    %133 = vmatprep.subr.mxu0 0.0
    %134 = vmatpush1.xpose.msra.mxu0 0.0
    %135 = vmatprep.subr.mxu0 0.0
    %136 = vmatpush1.xpose.msra.mxu0 0.0
    %137 = vmatprep.subr.mxu0 0.0
    %138 = vmatpush1.xpose.msra.mxu0 0.0
    %139 = vmatprep.subr.mxu0 0.0
    %140 = vmatpush1.xpose.msra.mxu0 0.0
    %141 = vmatprep.subr.mxu0 0.0
    %142 = vmatpush1.xpose.msra.mxu0 0.0
    %143 = vmatprep.subr.mxu0 0.0
    %144 = vmatpush1.xpose.msra.mxu0 0.0
    %145 = vmatprep.subr.mxu0 0.0
    %146 = vmatpush1.xpose.msra.mxu0 0.0
    %147 = vmatprep.subr.mxu0 0.0
    %148 = vmatpush1.xpose.msra.mxu0 0.0
    %149 = vmatprep.subr.mxu0 0.0
    %150 = vmatpush1.xpose.msra.mxu0 0.0
    %151 = vmatprep.subr.mxu0 0.0
    %152 = vmatpush1.xpose.msra.mxu0 0.0
    %153 = vmatprep.subr.mxu0 0.0
    %154 = vmatpush1.xpose.msra.mxu0 0.0
    %155 = vmatprep.subr.mxu0 0.0
    %156 = vmatpush1.xpose.msra.mxu0 0.0
    %157 = vmatprep.subr.mxu0 0.0
    %158 = vmatpush1.xpose.msra.mxu0 0.0
    %159 = vmatprep.subr.mxu0 0.0
    %160 = vmatpush1.xpose.msra.mxu0 0.0
    %161 = vmatprep.subr.mxu0 0.0
    %162 = vmatpush1.xpose.msra.mxu0 0.0
    %163 = vmatprep.subr.mxu0 0.0
    %164 = vmatpush1.xpose.msra.mxu0 0.0
    %165 = vmatprep.subr.mxu0 0.0
    %166 = vmatpush1.xpose.msra.mxu0 0.0
    %167 = vmatprep.subr.mxu0 0.0
    %168 = vmatpush1.xpose.msra.mxu0 0.0
    %169 = vmatprep.subr.mxu0 0.0
    %170 = vmatpush1.xpose.msra.mxu0 0.0
    %171 = vmatprep.mubr.f32.mxu0 %v36
    %172 = vmatmul.mubr.f32.gmra.mrb[0].mxu0 %v35
    %v173 = vpop.f32.mrb[0].mxu0
    %v174 = vadd.f32 0.0, %v173
    %v175 = vpop.f32.mrb[0].mxu0
    %176 = vmatprep.mubr.f32.mxu0 %v38
    %177 = vmatmul.mubr.f32.gmra.mrb[0].mxu0 %v37
    %v178 = vpop.f32.mrb[0].mxu0
    %v179 = vadd.f32 0.0, %v178
    %v180 = vpop.f32.mrb[0].mxu0
    %181 = vdwg.mxu0
    %v182 = vmul.f32 %v174, 2.0
    %v183 = vmul.f32 %v179, 2.0
    %v184 = vld [vmem:[%s3] sm:$0xff]
    %v185 = vld [vmem:[%s3 + $0x8] sm:$0xff]
    %v186 = vld [vmem:[%s3 + $0x10] sm:$0xff]
    %v187 = vld [vmem:[%s3 + $0x18] sm:$0xff]
    %v188 = vld [vmem:[%s3 + $0x20] sm:$0xff]
    %v189 = vld [vmem:[%s3 + $0x28] sm:$0xff]
    %v190 = vld [vmem:[%s3 + $0x30] sm:$0xff]
    %v191 = vld [vmem:[%s3 + $0x38] sm:$0xff]
    %v192 = vld [vmem:[%s3 + $0x40] sm:$0xff]
    %v193 = vld [vmem:[%s3 + $0x48] sm:$0xff]
    %v194 = vld [vmem:[%s3 + $0x50] sm:$0xff]
    %v195 = vld [vmem:[%s3 + $0x58] sm:$0xff]
    %v196 = vld [vmem:[%s3 + $0x60] sm:$0xff]
    %v197 = vld [vmem:[%s3 + $0x68] sm:$0xff]
    %v198 = vld [vmem:[%s3 + $0x70] sm:$0xff]
    %v199 = vld [vmem:[%s3 + $0x78] sm:$0xff]
    %v200 = vld [vmem:[%s3 + $0x80] sm:$0xff]
    %v201 = vld [vmem:[%s3 + $0x88] sm:$0xff]
    %v202 = vld [vmem:[%s3 + $0x90] sm:$0xff]
    %v203 = vld [vmem:[%s3 + $0x98] sm:$0xff]
    %v204 = vld [vmem:[%s3 + $0xa0] sm:$0xff]
    %v205 = vld [vmem:[%s3 + $0xa8] sm:$0xff]
    %v206 = vld [vmem:[%s3 + $0xb0] sm:$0xff]
    %v207 = vld [vmem:[%s3 + $0xb8] sm:$0xff]
    %v208 = vld [vmem:[%s3 + $0xc0] sm:$0xff]
    %v209 = vld [vmem:[%s3 + $0xc8] sm:$0xff]
    %v210 = vld [vmem:[%s3 + $0xd0] sm:$0xff]
    %v211 = vld [vmem:[%s3 + $0xd8] sm:$0xff]
    %v212 = vld [vmem:[%s3 + $0xe0] sm:$0xff]
    %v213 = vld [vmem:[%s3 + $0xe8] sm:$0xff]
    %v214 = vld [vmem:[%s3 + $0xf0] sm:$0xff]
    %v215 = vld [vmem:[%s3 + $0xf8] sm:$0xff]
    %vm216 = vcmask 31744
    %v218 = vsel %vm216, %v182, 0
    %v221 = vsel %vm216, %v183, 0
    %v224 = vsel %vm216, %v184, 0
    %v227 = vsel %vm216, %v185, 0
    %v230 = vsel %vm216, %v186, 0
    %v233 = vsel %vm216, %v187, 0
    %v236 = vsel %vm216, %v188, 0
    %v239 = vsel %vm216, %v189, 0
    %v242 = vsel %vm216, %v190, 0
    %v245 = vsel %vm216, %v191, 0
    %v248 = vsel %vm216, %v192, 0
    %v251 = vsel %vm216, %v193, 0
    %v254 = vsel %vm216, %v194, 0
    %v257 = vsel %vm216, %v195, 0
    %v260 = vsel %vm216, %v196, 0
    %v263 = vsel %vm216, %v197, 0
    %v266 = vsel %vm216, %v198, 0
    %v269 = vsel %vm216, %v199, 0
    %v272 = vsel %vm216, %v200, 0
    %v275 = vsel %vm216, %v201, 0
    %v278 = vsel %vm216, %v202, 0
    %v281 = vsel %vm216, %v203, 0
    %v284 = vsel %vm216, %v204, 0
    %v287 = vsel %vm216, %v205, 0
    %v290 = vsel %vm216, %v206, 0
    %v293 = vsel %vm216, %v207, 0
    %v296 = vsel %vm216, %v208, 0
    %v299 = vsel %vm216, %v209, 0
    %v302 = vsel %vm216, %v210, 0
    %v305 = vsel %vm216, %v211, 0
    %v308 = vsel %vm216, %v212, 0
    %v311 = vsel %vm216, %v213, 0
    %v314 = vsel %vm216, %v214, 0
    %v317 = vsel %vm216, %v215, 0
    %319 = vmatprep.subr.mxu0 0.0
    %320 = vmatpush1.xpose.msra.mxu0 %v224
    %321 = vmatprep.subr.mxu0 0.0
    %322 = vmatpush1.xpose.msra.mxu0 %v227
    %323 = vmatprep.subr.mxu0 0.0
    %324 = vmatpush1.xpose.msra.mxu0 %v230
    %325 = vmatprep.subr.mxu0 0.0
    %326 = vmatpush1.xpose.msra.mxu0 %v233
    %327 = vmatprep.subr.mxu0 0.0
    %328 = vmatpush1.xpose.msra.mxu0 %v236
    %329 = vmatprep.subr.mxu0 0.0
    %330 = vmatpush1.xpose.msra.mxu0 %v239
    %331 = vmatprep.subr.mxu0 0.0
    %332 = vmatpush1.xpose.msra.mxu0 %v242
    %333 = vmatprep.subr.mxu0 0.0
    %334 = vmatpush1.xpose.msra.mxu0 %v245
    %335 = vmatprep.subr.mxu0 0.0
    %336 = vmatpush1.xpose.msra.mxu0 %v248
    %337 = vmatprep.subr.mxu0 0.0
    %338 = vmatpush1.xpose.msra.mxu0 %v251
    %339 = vmatprep.subr.mxu0 0.0
    %340 = vmatpush1.xpose.msra.mxu0 %v254
    %341 = vmatprep.subr.mxu0 0.0
    %342 = vmatpush1.xpose.msra.mxu0 %v257
    %343 = vmatprep.subr.mxu0 0.0
    %344 = vmatpush1.xpose.msra.mxu0 %v260
    %345 = vmatprep.subr.mxu0 0.0
    %346 = vmatpush1.xpose.msra.mxu0 %v263
    %347 = vmatprep.subr.mxu0 0.0
    %348 = vmatpush1.xpose.msra.mxu0 %v266
    %349 = vmatprep.subr.mxu0 0.0
    %350 = vmatpush1.xpose.msra.mxu0 %v269
    %351 = vmatprep.subr.mxu0 0.0
    %352 = vmatpush1.xpose.msra.mxu0 %v272
    %353 = vmatprep.subr.mxu0 0.0
    %354 = vmatpush1.xpose.msra.mxu0 %v275
    %355 = vmatprep.subr.mxu0 0.0
    %356 = vmatpush1.xpose.msra.mxu0 %v278
    %357 = vmatprep.subr.mxu0 0.0
    %358 = vmatpush1.xpose.msra.mxu0 %v281
    %359 = vmatprep.subr.mxu0 0.0
    %360 = vmatpush1.xpose.msra.mxu0 %v284
    %361 = vmatprep.subr.mxu0 0.0
    %362 = vmatpush1.xpose.msra.mxu0 %v287
    %363 = vmatprep.subr.mxu0 0.0
    %364 = vmatpush1.xpose.msra.mxu0 %v290
    %365 = vmatprep.subr.mxu0 0.0
    %366 = vmatpush1.xpose.msra.mxu0 %v293
    %367 = vmatprep.subr.mxu0 0.0
    %368 = vmatpush1.xpose.msra.mxu0 %v296
    %369 = vmatprep.subr.mxu0 0.0
    %370 = vmatpush1.xpose.msra.mxu0 %v299
    %371 = vmatprep.subr.mxu0 0.0
    %372 = vmatpush1.xpose.msra.mxu0 %v302
    %373 = vmatprep.subr.mxu0 0.0
    %374 = vmatpush1.xpose.msra.mxu0 %v305
    %375 = vmatprep.subr.mxu0 0.0
    %376 = vmatpush1.xpose.msra.mxu0 %v308
    %377 = vmatprep.subr.mxu0 0.0
    %378 = vmatpush1.xpose.msra.mxu0 %v311
    %379 = vmatprep.subr.mxu0 0.0
    %380 = vmatpush1.xpose.msra.mxu0 %v314
    %381 = vmatprep.subr.mxu0 0.0
    %382 = vmatpush1.xpose.msra.mxu0 %v317
    %383 = vmatprep.mubr.f32.mxu0 0.0
    %384 = vmatmul.mubr.f32.gmra.mrb[0].mxu0 %v218
    %v385 = vpop.f32.mrb[0].mxu0
    %v386 = vadd.f32 0.0, %v385
    %v387 = vpop.f32.mrb[0].mxu0
    %v388 = vadd.f32 0.0, %v387
    %389 = vmatprep.mubr.f32.mxu0 0.0
    %390 = vmatmul.mubr.f32.gmra.mrb[0].mxu0 %v221
    %v391 = vpop.f32.mrb[0].mxu0
    %v392 = vadd.f32 0.0, %v391
    %v393 = vpop.f32.mrb[0].mxu0
    %v394 = vadd.f32 0.0, %v393
    %395 = vdwg.mxu0
    %396 = vmatprep.subr.mxu0 %v40
    %397 = vmatpush1.xpose.msra.mxu0 %v39
    %398 = vmatprep.subr.mxu0 %v42
    %399 = vmatpush1.xpose.msra.mxu0 %v41
    %400 = vmatprep.subr.mxu0 %v44
    %401 = vmatpush1.xpose.msra.mxu0 %v43
    %402 = vmatprep.subr.mxu0 %v46
    %403 = vmatpush1.xpose.msra.mxu0 %v45
    %404 = vmatprep.subr.mxu0 %v48
    %405 = vmatpush1.xpose.msra.mxu0 %v47
    %406 = vmatprep.subr.mxu0 %v50
    %407 = vmatpush1.xpose.msra.mxu0 %v49
    %408 = vmatprep.subr.mxu0 %v52
    %409 = vmatpush1.xpose.msra.mxu0 %v51
    %410 = vmatprep.subr.mxu0 %v54
    %411 = vmatpush1.xpose.msra.mxu0 %v53
    %412 = vmatprep.subr.mxu0 %v56
    %413 = vmatpush1.xpose.msra.mxu0 %v55
    %414 = vmatprep.subr.mxu0 %v58
    %415 = vmatpush1.xpose.msra.mxu0 %v57
    %416 = vmatprep.subr.mxu0 %v60
    %417 = vmatpush1.xpose.msra.mxu0 %v59
    %418 = vmatprep.subr.mxu0 %v62
    %419 = vmatpush1.xpose.msra.mxu0 %v61
    %420 = vmatprep.subr.mxu0 %v64
    %421 = vmatpush1.xpose.msra.mxu0 %v63
    %422 = vmatprep.subr.mxu0 %v66
    %423 = vmatpush1.xpose.msra.mxu0 %v65
    %424 = vmatprep.subr.mxu0 %v68
    %425 = vmatpush1.xpose.msra.mxu0 %v67
    %426 = vmatprep.subr.mxu0 %v70
    %427 = vmatpush1.xpose.msra.mxu0 %v69
    %428 = vmatprep.subr.mxu0 %v72
    %429 = vmatpush1.xpose.msra.mxu0 %v71
    %430 = vmatprep.subr.mxu0 %v74
    %431 = vmatpush1.xpose.msra.mxu0 %v73
    %432 = vmatprep.subr.mxu0 %v76
    %433 = vmatpush1.xpose.msra.mxu0 %v75
    %434 = vmatprep.subr.mxu0 %v78
    %435 = vmatpush1.xpose.msra.mxu0 %v77
    %436 = vmatprep.subr.mxu0 %v80
    %437 = vmatpush1.xpose.msra.mxu0 %v79
    %438 = vmatprep.subr.mxu0 %v82
    %439 = vmatpush1.xpose.msra.mxu0 %v81
    %440 = vmatprep.subr.mxu0 %v84
    %441 = vmatpush1.xpose.msra.mxu0 %v83
    %442 = vmatprep.subr.mxu0 %v86
    %443 = vmatpush1.xpose.msra.mxu0 %v85
    %444 = vmatprep.subr.mxu0 %v88
    %445 = vmatpush1.xpose.msra.mxu0 %v87
    %446 = vmatprep.subr.mxu0 %v90
    %447 = vmatpush1.xpose.msra.mxu0 %v89
    %448 = vmatprep.subr.mxu0 %v92
    %449 = vmatpush1.xpose.msra.mxu0 %v91
    %450 = vmatprep.subr.mxu0 %v94
    %451 = vmatpush1.xpose.msra.mxu0 %v93
    %452 = vmatprep.subr.mxu0 %v96
    %453 = vmatpush1.xpose.msra.mxu0 %v95
    %454 = vmatprep.subr.mxu0 %v98
    %455 = vmatpush1.xpose.msra.mxu0 %v97
    %456 = vmatprep.subr.mxu0 %v100
    %457 = vmatpush1.xpose.msra.mxu0 %v99
    %458 = vmatprep.subr.mxu0 %v102
    %459 = vmatpush1.xpose.msra.mxu0 %v101
    %460 = vmatprep.mubr.f32.mxu0 %v36
    %461 = vmatmul.mubr.f32.gmra.mrb[0].mxu0 %v35
    %v462 = vpop.f32.mrb[0].mxu0
    %v463 = vadd.f32 %v386, %v462
    %v464 = vpop.f32.mrb[0].mxu0
    %v465 = vadd.f32 %v388, %v464
    %466 = vmatprep.mubr.f32.mxu0 %v38
    %467 = vmatmul.mubr.f32.gmra.mrb[0].mxu0 %v37
    %v468 = vpop.f32.mrb[0].mxu0
    %v469 = vadd.f32 %v392, %v468
    %v470 = vpop.f32.mrb[0].mxu0
    %v471 = vadd.f32 %v394, %v470
    %472 = vdwg.mxu0
    %v473 = vld [vmem:[%s4] sm:$0x3]
    %v475 = vlaneseq
    %v476 = vshrl.u32 %v475, 7
    %v477 = vsub.s32 0, %v476
    %v478 = vrot.slane %v473, %v477
    %v479 = vlaneseq
    %v480 = vshrl.u32 %v479, 7
    %v481 = vsub.s32 1, %v480
    %v482 = vrot.slane %v473, %v481
    %v485 = vadd.f32 %v463, %v478
    %v486 = vadd.f32 %v465, %v482
    %v487 = vadd.f32 %v469, %v478
    %v488 = vadd.f32 %v471, %v482
    %489 = vst [vmem:[#allocation5] sm:$0xff] %v485
    %490 = vst [vmem:[#allocation5 + $0x8] sm:$0xff] %v486
    %491 = vst [vmem:[#allocation5 + $0x10] sm:$0xff] %v487
    %492 = vst [vmem:[#allocation5 + $0x18] sm:$0xff] %v488
    // Predicated region
    $region26: #{tpu_custom_call.1} parent=1 // pred_check
      _
    $region27: #{tpu_custom_call.1} parent=1 // pred_check_branch
      %494 = sbr.rel (0) target = $region29
    $region28: #{tpu_custom_call.1} parent=1 // pred_region
      %s496 = ssub.s32 512, 512
      %497 = vsyncadd [#allocation4], %s496
      %s498 = sshll.u32 [#allocation5], 4
      %s499 = int_to_ptr.vmem [resolvable:$true] %s498
      %504 = dma.vmem_to_hbm [thread:$0]  %s499, 512, %s5, [#allocation4], 256, 256, 16
    $region29: #{tpu_custom_call.1} parent=1 // pred_fallthru
      _
    // Predicated region
    $region30: #{tpu_custom_call.1} parent=1 // pred_check
      _
    $region31: #{tpu_custom_call.1} parent=1 // pred_check_branch
      %506 = sbr.rel (0) target = $region33
    $region32: #{tpu_custom_call.1} parent=1 // pred_region
      %507 = dma.done [#allocation4], 512
    $region33: #{tpu_custom_call.1} parent=1 // pred_fallthru
      _
    %508 = vsyncpa [#allocation3], 1
    %509 = vsyncpa [#allocation4], 1

</llo_original>
